<compile_context>
chip_gen: v5e
topology: v5e:2x2
jax: 0.10.0
libtpu: 0.0.40
codegen_flags: <defaults>
</compile_context>

<pallas_src>
import functools
import math

import jax
import jax.numpy as jnp
from jax import lax
from jax.experimental import pallas as pl
from jax.experimental.pallas import tpu as pltpu

_LANE = 128   # lane width
_SUB = 8      # f32 sublanes per vreg


def _edice_partial_kernel(x_ref, t_ref, st_ref, ss_ref, tt_ref, *,
                          do_sigmoid: bool, r: int, nkh: int, chunk: int,
                          n_full: int, m_valid: int, mask_needed: bool):
    """Accumulate lane-partial sum(s*t), sum(s*s), sum(t*t) per (p, channel)."""
    p = pl.program_id(0)
    n = pl.program_id(2)
    k = pl.program_id(3)

    # First visit of this (p, c) output block: zero the (8,128) accumulators.
    @pl.when((n == 0) & (k == 0))
    def _():
        st_ref[...] = jnp.zeros_like(st_ref)
        ss_ref[...] = jnp.zeros_like(ss_ref)
        tt_ref[...] = jnp.zeros_like(tt_ref)

    gk = p * nkh + k              # global reduction-tile index along S
    slice_elems = _SUB * _LANE

    def run(masked):
        if masked:
            sub = lax.broadcasted_iota(jnp.int32, (_SUB, _LANE), 0)
            ln = lax.broadcasted_iota(jnp.int32, (_SUB, _LANE), 1)
            base = sub * _LANE + ln          # element offset within an 8x128 slice
            limit = m_valid - gk * chunk     # valid elements remaining in this tile

        def body(i, carry):
            st, ss, tt = carry
            off = pl.multiple_of(i * _SUB, _SUB)
            xv = x_ref[pl.ds(off, _SUB), :].astype(jnp.float32)
            tv = t_ref[pl.ds(off, _SUB), :].astype(jnp.float32)
            s = jax.nn.sigmoid(xv) if do_sigmoid else xv
            if masked:
                m = base < (limit - i * slice_elems)
                s = jnp.where(m, s, 0.0)
                tv = jnp.where(m, tv, 0.0)
            return st + s * tv, ss + s * s, tt + tv * tv

        zero = jnp.zeros((_SUB, _LANE), jnp.float32)
        st, ss, tt = lax.fori_loop(0, r, body, (zero, zero, zero))
        st_ref[...] += st
        ss_ref[...] += ss
        tt_ref[...] += tt

    if mask_needed:
        # Fully-valid tiles take the cheap path; only tail/overflow tiles mask.
        @pl.when(gk < n_full)
        def _():
            run(False)

        @pl.when(gk >= n_full)
        def _():
            run(True)
    else:
        run(False)


def edice_loss(inputs, target, *, do_sigmoid: bool = True,
               ts: int = 2048, p_split: int = 2):
    """Pallas implementation of EDiceLoss.forward (returns a scalar)."""
    assert inputs.shape == target.shape
    N, C = int(inputs.shape[0]), int(inputs.shape[1])
    M = int(math.prod(inputs.shape[2:]))          # elements per (n, c) row
    cdiv = lambda a, b: -(-a // b)

    # Free reshape of the native NC(spatial) layout; keep native dtypes.
    x = inputs.reshape(N, C, M)
    t = target.reshape(N, C, M)

    # Only pad (a copy) if the row length is not lane-aligned; pad values are
    # masked in-kernel, so 0 is fine for both the sigmoid and non-sigmoid path.
    if M % _LANE:
        m_pad = cdiv(M, _LANE) * _LANE
        x = jnp.pad(x, ((0, 0), (0, 0), (0, m_pad - M)))
        t = jnp.pad(t, ((0, 0), (0, 0), (0, m_pad - M)))
    else:
        m_pad = M

    S = m_pad // _LANE
    ts_eff = min(int(ts), cdiv(S, _SUB) * _SUB)
    ts_eff = max(_SUB, (ts_eff // _SUB) * _SUB)   # multiple of 8 sublanes
    chunk = ts_eff * _LANE                        # elements per reduction tile
    nK = cdiv(S, ts_eff)                          # reduction tiles per (n, c)
    P = max(1, int(p_split))                      # megacore split of reduction
    nKh = cdiv(nK, P)
    n_full = M // chunk                           # tiles with no invalid elems
    mask_needed = (M % chunk != 0) or (nK % P != 0)
    r = ts_eff // _SUB                            # 8x128 slices per tile

    x = x.reshape(N, C, S, _LANE)                 # free reshape
    t = t.reshape(N, C, S, _LANE)

    def in_map(p, c, n, k):
        # Clamp overflow steps of the P-split; their contribution is masked.
        return (n, c, jnp.minimum(p * nKh + k, nK - 1), 0)

    def out_map(p, c, n, k):
        return (p, c, 0, 0)

    kernel = functools.partial(
        _edice_partial_kernel, do_sigmoid=do_sigmoid, r=r, nkh=nKh,
        chunk=chunk, n_full=n_full, m_valid=M, mask_needed=mask_needed)

    out_sds = jax.ShapeDtypeStruct((P, C, _SUB, _LANE), jnp.float32)
    st, ss, tt = pl.pallas_call(
        kernel,
        out_shape=(out_sds, out_sds, out_sds),
        grid_spec=pltpu.PrefetchScalarGridSpec(
            num_scalar_prefetch=0,
            grid=(P, C, N, nKh),
            in_specs=[
                pl.BlockSpec((None, None, ts_eff, _LANE), in_map),
                pl.BlockSpec((None, None, ts_eff, _LANE), in_map),
            ],
            out_specs=[
                pl.BlockSpec((None, None, _SUB, _LANE), out_map),
                pl.BlockSpec((None, None, _SUB, _LANE), out_map),
                pl.BlockSpec((None, None, _SUB, _LANE), out_map),
            ],
        ),
        compiler_params=pltpu.CompilerParams(
            dimension_semantics=("parallel", "parallel",
                                 "arbitrary", "arbitrary")),
    )(x, t)

    # Tiny combine + dice formula in plain JAX (per reviewer suggestion).
    smooth = jnp.float32(1.0)
    inter = jnp.sum(st, axis=(0, 2, 3))           # (C,)
    s2 = jnp.sum(ss, axis=(0, 2, 3))
    t2 = jnp.sum(tt, axis=(0, 2, 3))
    dice = (2.0 * inter + smooth) / (s2 + t2 + smooth)
    # forward(): sum_i (1 - dice_i) / C  == mean of per-channel losses.
    return jnp.mean(1.0 - dice)


def _edice_loss_ref(inputs, target, do_sigmoid: bool = True):
    """Plain-JAX reference mirroring the PyTorch module."""
    xf = inputs.astype(jnp.float32)
    tf = target.astype(jnp.float32)
    s = jax.nn.sigmoid(xf) if do_sigmoid else xf
    red = tuple(i for i in range(xf.ndim) if i != 1)
    inter = jnp.sum(s * tf, axis=red)
    dice = (2.0 * inter + 1.0) / (jnp.sum(s * s, axis=red)
                                  + jnp.sum(tf * tf, axis=red) + 1.0)
    return jnp.mean(1.0 - dice)


if __name__ == "__main__":
    key = jax.random.PRNGKey(0)
    k_in, k_tgt = jax.random.split(key)

    # BraTS-style: batch=2, channels=3 (ET, TC, WT), spatial 16x16.
    inputs = jax.random.normal(k_in, (2, 3, 16, 16), dtype=jnp.float32)
    target = (jax.random.uniform(k_tgt, (2, 3, 16, 16)) > 0.5).astype(jnp.float32)

    loss = jax.block_until_ready(edice_loss(inputs, target))
    ref = jax.block_until_ready(_edice_loss_ref(inputs, target))
    assert jnp.allclose(loss, ref, rtol=1e-5, atol=1e-6), (loss, ref)

    # Non-lane-aligned spatial size + do_sigmoid=False path (in-kernel masking).
    k3, k4 = jax.random.split(k_tgt)
    inputs2 = jax.random.uniform(k3, (2, 3, 12, 20), dtype=jnp.float32)
    target2 = (jax.random.uniform(k4, (2, 3, 12, 20)) > 0.5).astype(jnp.float32)
    loss2 = jax.block_until_ready(edice_loss(inputs2, target2, do_sigmoid=False))
    ref2 = jax.block_until_ready(_edice_loss_ref(inputs2, target2, do_sigmoid=False))
    assert jnp.allclose(loss2, ref2, rtol=1e-5, atol=1e-6), (loss2, ref2)

    print("KERNEL_OK")
</pallas_src>

<mosaic_0001>
module attributes {stable_mosaic.version = 11 : i64} {
  func.func @_edice_partial_kernel(%arg0: i32, %arg1: i32, %arg2: i32, %arg3: i32, %arg4: memref<1x1x8x128xf32, #tpu.memory_space<vmem>>, %arg5: memref<1x1x8x128xf32, #tpu.memory_space<vmem>>, %arg6: memref<1x1x8x128xf32, #tpu.memory_space<vmem>>, %arg7: memref<1x1x8x128xf32, #tpu.memory_space<vmem>>, %arg8: memref<1x1x8x128xf32, #tpu.memory_space<vmem>>) attributes {dimension_semantics = [#tpu.dimension_semantics<parallel>, #tpu.dimension_semantics<parallel>, #tpu.dimension_semantics<arbitrary>, #tpu.dimension_semantics<arbitrary>], iteration_bounds = array<i64: 2, 3, 2, 1>, scalar_prefetch = 0 : i64, scratch_operands = 0 : i64, tpu.core_type = #tpu.core_type<tc>, window_params = [{transform_indices = @transform_0, window_bounds = array<i64: 1, 1, 8, 128>}, {transform_indices = @transform_1, window_bounds = array<i64: 1, 1, 8, 128>}, {transform_indices = @transform_2, window_bounds = array<i64: 1, 1, 8, 128>}, {transform_indices = @transform_3, window_bounds = array<i64: 1, 1, 8, 128>}, {transform_indices = @transform_4, window_bounds = array<i64: 1, 1, 8, 128>}]} {
    %c0_i32 = arith.constant 0 : i32
    %0 = arith.cmpi eq, %arg2, %c0_i32 : i32
    %c0_i32_0 = arith.constant 0 : i32
    %1 = arith.cmpi eq, %arg3, %c0_i32_0 : i32
    %2 = arith.andi %0, %1 : i1
    %3 = arith.extui %2 : i1 to i32
    %c0_i32_1 = arith.constant 0 : i32
    %4 = arith.cmpi ne, %3, %c0_i32_1 : i32
    scf.if %4 {
      %cst = arith.constant 0.000000e+00 : f32
      %13 = vector.broadcast %cst : f32 to vector<8x128xf32>
      %c0 = arith.constant 0 : index
      %c0_6 = arith.constant 0 : index
      %c0_7 = arith.constant 0 : index
      %c0_8 = arith.constant 0 : index
      %14 = vector.load %arg6[%c0, %c0_6, %c0_7, %c0_8] : memref<1x1x8x128xf32, #tpu.memory_space<vmem>>, vector<1x1x8x128xf32>
      %15 = vector.shape_cast %14 : vector<1x1x8x128xf32> to vector<8x128xf32>
      %16 = vector.shape_cast %13 : vector<8x128xf32> to vector<1x1x8x128xf32>
      tpu.vector_store %arg6[%c0, %c0_6, %c0_7, %c0_8], %16 {strides = array<i32>} : memref<1x1x8x128xf32, #tpu.memory_space<vmem>>, vector<1x1x8x128xf32>,
      %cst_9 = arith.constant 0.000000e+00 : f32
      %17 = vector.broadcast %cst_9 : f32 to vector<8x128xf32>
      %c0_10 = arith.constant 0 : index
      %c0_11 = arith.constant 0 : index
      %c0_12 = arith.constant 0 : index
      %c0_13 = arith.constant 0 : index
      %18 = vector.load %arg7[%c0_10, %c0_11, %c0_12, %c0_13] : memref<1x1x8x128xf32, #tpu.memory_space<vmem>>, vector<1x1x8x128xf32>
      %19 = vector.shape_cast %18 : vector<1x1x8x128xf32> to vector<8x128xf32>
      %20 = vector.shape_cast %17 : vector<8x128xf32> to vector<1x1x8x128xf32>
      tpu.vector_store %arg7[%c0_10, %c0_11, %c0_12, %c0_13], %20 {strides = array<i32>} : memref<1x1x8x128xf32, #tpu.memory_space<vmem>>, vector<1x1x8x128xf32>,
      %cst_14 = arith.constant 0.000000e+00 : f32
      %21 = vector.broadcast %cst_14 : f32 to vector<8x128xf32>
      %c0_15 = arith.constant 0 : index
      %c0_16 = arith.constant 0 : index
      %c0_17 = arith.constant 0 : index
      %c0_18 = arith.constant 0 : index
      %22 = vector.load %arg8[%c0_15, %c0_16, %c0_17, %c0_18] : memref<1x1x8x128xf32, #tpu.memory_space<vmem>>, vector<1x1x8x128xf32>
      %23 = vector.shape_cast %22 : vector<1x1x8x128xf32> to vector<8x128xf32>
      %24 = vector.shape_cast %21 : vector<8x128xf32> to vector<1x1x8x128xf32>
      tpu.vector_store %arg8[%c0_15, %c0_16, %c0_17, %c0_18], %24 {strides = array<i32>} : memref<1x1x8x128xf32, #tpu.memory_space<vmem>>, vector<1x1x8x128xf32>,
    } else {
    }
    %c1_i32 = arith.constant 1 : i32
    %5 = arith.muli %arg0, %c1_i32 : i32
    %6 = arith.addi %5, %arg3 : i32
    %c0_i32_2 = arith.constant 0 : i32
    %7 = arith.cmpi slt, %6, %c0_i32_2 : i32
    %8 = arith.extui %7 : i1 to i32
    %c0_i32_3 = arith.constant 0 : i32
    %9 = arith.cmpi ne, %8, %c0_i32_3 : i32
    scf.if %9 {
      %cst = arith.constant 0.000000e+00 : f32
      %13 = vector.broadcast %cst : f32 to vector<8x128xf32>
      %c0_i32_6 = arith.constant 0 : i32
      %c8_i32 = arith.constant 8 : i32
      %14 = arith.muli %c0_i32_6, %c8_i32 : i32
      %15 = tpu.assume_multiple %14, 8 : i32
      %c0 = arith.constant 0 : index
      %c0_7 = arith.constant 0 : index
      %16 = arith.index_cast %15 : i32 to index
      %c0_8 = arith.constant 0 : index
      %17 = vector.load %arg4[%c0, %c0_7, %16, %c0_8] : memref<1x1x8x128xf32, #tpu.memory_space<vmem>>, vector<1x1x8x128xf32>
      %18 = vector.shape_cast %17 : vector<1x1x8x128xf32> to vector<8x128xf32>
      %c0_9 = arith.constant 0 : index
      %c0_10 = arith.constant 0 : index
      %19 = arith.index_cast %15 : i32 to index
      %c0_11 = arith.constant 0 : index
      %20 = vector.load %arg5[%c0_9, %c0_10, %19, %c0_11] : memref<1x1x8x128xf32, #tpu.memory_space<vmem>>, vector<1x1x8x128xf32>
      %21 = vector.shape_cast %20 : vector<1x1x8x128xf32> to vector<8x128xf32>
      %22 = arith.negf %18 : vector<8x128xf32>
      %23 = math.exp %22 : vector<8x128xf32>
      %cst_12 = arith.constant 1.000000e+00 : f32
      %24 = vector.broadcast %cst_12 : f32 to vector<8x128xf32>
      %25 = arith.addf %24, %23 : vector<8x128xf32>
      %26 = arith.divf %24, %25 : vector<8x128xf32>
      %27 = arith.mulf %26, %21 : vector<8x128xf32>
      %28 = arith.addf %13, %27 : vector<8x128xf32>
      %29 = arith.mulf %26, %26 : vector<8x128xf32>
      %30 = arith.addf %13, %29 : vector<8x128xf32>
      %31 = arith.mulf %21, %21 : vector<8x128xf32>
      %32 = arith.addf %13, %31 : vector<8x128xf32>
      %c1_i32_13 = arith.constant 1 : i32
      %c0_14 = arith.constant 0 : index
      %c0_15 = arith.constant 0 : index
      %c0_16 = arith.constant 0 : index
      %c0_17 = arith.constant 0 : index
      %33 = vector.load %arg6[%c0_14, %c0_15, %c0_16, %c0_17] : memref<1x1x8x128xf32, #tpu.memory_space<vmem>>, vector<1x1x8x128xf32>
      %34 = vector.shape_cast %33 : vector<1x1x8x128xf32> to vector<8x128xf32>
      %35 = arith.addf %34, %28 : vector<8x128xf32>
      %c0_18 = arith.constant 0 : index
      %c0_19 = arith.constant 0 : index
      %c0_20 = arith.constant 0 : index
      %c0_21 = arith.constant 0 : index
      %36 = vector.load %arg6[%c0_18, %c0_19, %c0_20, %c0_21] : memref<1x1x8x128xf32, #tpu.memory_space<vmem>>, vector<1x1x8x128xf32>
      %37 = vector.shape_cast %36 : vector<1x1x8x128xf32> to vector<8x128xf32>
      %38 = vector.shape_cast %35 : vector<8x128xf32> to vector<1x1x8x128xf32>
      tpu.vector_store %arg6[%c0_18, %c0_19, %c0_20, %c0_21], %38 {strides = array<i32>} : memref<1x1x8x128xf32, #tpu.memory_space<vmem>>, vector<1x1x8x128xf32>,
      %c0_22 = arith.constant 0 : index
      %c0_23 = arith.constant 0 : index
      %c0_24 = arith.constant 0 : index
      %c0_25 = arith.constant 0 : index
      %39 = vector.load %arg7[%c0_22, %c0_23, %c0_24, %c0_25] : memref<1x1x8x128xf32, #tpu.memory_space<vmem>>, vector<1x1x8x128xf32>
      %40 = vector.shape_cast %39 : vector<1x1x8x128xf32> to vector<8x128xf32>
      %41 = arith.addf %40, %30 : vector<8x128xf32>
      %c0_26 = arith.constant 0 : index
      %c0_27 = arith.constant 0 : index
      %c0_28 = arith.constant 0 : index
      %c0_29 = arith.constant 0 : index
      %42 = vector.load %arg7[%c0_26, %c0_27, %c0_28, %c0_29] : memref<1x1x8x128xf32, #tpu.memory_space<vmem>>, vector<1x1x8x128xf32>
      %43 = vector.shape_cast %42 : vector<1x1x8x128xf32> to vector<8x128xf32>
      %44 = vector.shape_cast %41 : vector<8x128xf32> to vector<1x1x8x128xf32>
      tpu.vector_store %arg7[%c0_26, %c0_27, %c0_28, %c0_29], %44 {strides = array<i32>} : memref<1x1x8x128xf32, #tpu.memory_space<vmem>>, vector<1x1x8x128xf32>,
      %c0_30 = arith.constant 0 : index
      %c0_31 = arith.constant 0 : index
      %c0_32 = arith.constant 0 : index
      %c0_33 = arith.constant 0 : index
      %45 = vector.load %arg8[%c0_30, %c0_31, %c0_32, %c0_33] : memref<1x1x8x128xf32, #tpu.memory_space<vmem>>, vector<1x1x8x128xf32>
      %46 = vector.shape_cast %45 : vector<1x1x8x128xf32> to vector<8x128xf32>
      %47 = arith.addf %46, %32 : vector<8x128xf32>
      %c0_34 = arith.constant 0 : index
      %c0_35 = arith.constant 0 : index
      %c0_36 = arith.constant 0 : index
      %c0_37 = arith.constant 0 : index
      %48 = vector.load %arg8[%c0_34, %c0_35, %c0_36, %c0_37] : memref<1x1x8x128xf32, #tpu.memory_space<vmem>>, vector<1x1x8x128xf32>
      %49 = vector.shape_cast %48 : vector<1x1x8x128xf32> to vector<8x128xf32>
      %50 = vector.shape_cast %47 : vector<8x128xf32> to vector<1x1x8x128xf32>
      tpu.vector_store %arg8[%c0_34, %c0_35, %c0_36, %c0_37], %50 {strides = array<i32>} : memref<1x1x8x128xf32, #tpu.memory_space<vmem>>, vector<1x1x8x128xf32>,
    } else {
    }
    %c0_i32_4 = arith.constant 0 : i32
    %10 = arith.cmpi sge, %6, %c0_i32_4 : i32
    %11 = arith.extui %10 : i1 to i32
    %c0_i32_5 = arith.constant 0 : i32
    %12 = arith.cmpi ne, %11, %c0_i32_5 : i32
    scf.if %12 {
      %13 = tpu.iota {dimensions = array<i32: 0>} : vector<8x128xi32>
      %14 = tpu.iota {dimensions = array<i32: 1>} : vector<8x128xi32>
      %c128_i32 = arith.constant 128 : i32
      %15 = vector.broadcast %c128_i32 : i32 to vector<8x128xi32>
      %16 = arith.muli %13, %15 : vector<8x128xi32>
      %17 = arith.addi %16, %14 : vector<8x128xi32>
      %c1024_i32 = arith.constant 1024 : i32
      %18 = arith.muli %6, %c1024_i32 : i32
      %c256_i32 = arith.constant 256 : i32
      %19 = arith.subi %c256_i32, %18 : i32
      %cst = arith.constant 0.000000e+00 : f32
      %20 = vector.broadcast %cst : f32 to vector<8x128xf32>
      %c0_i32_6 = arith.constant 0 : i32
      %c8_i32 = arith.constant 8 : i32
      %21 = arith.muli %c0_i32_6, %c8_i32 : i32
      %22 = tpu.assume_multiple %21, 8 : i32
      %c0 = arith.constant 0 : index
      %c0_7 = arith.constant 0 : index
      %23 = arith.index_cast %22 : i32 to index
      %c0_8 = arith.constant 0 : index
      %24 = vector.load %arg4[%c0, %c0_7, %23, %c0_8] : memref<1x1x8x128xf32, #tpu.memory_space<vmem>>, vector<1x1x8x128xf32>
      %25 = vector.shape_cast %24 : vector<1x1x8x128xf32> to vector<8x128xf32>
      %c0_9 = arith.constant 0 : index
      %c0_10 = arith.constant 0 : index
      %26 = arith.index_cast %22 : i32 to index
      %c0_11 = arith.constant 0 : index
      %27 = vector.load %arg5[%c0_9, %c0_10, %26, %c0_11] : memref<1x1x8x128xf32, #tpu.memory_space<vmem>>, vector<1x1x8x128xf32>
      %28 = vector.shape_cast %27 : vector<1x1x8x128xf32> to vector<8x128xf32>
      %29 = arith.negf %25 : vector<8x128xf32>
      %30 = math.exp %29 : vector<8x128xf32>
      %cst_12 = arith.constant 1.000000e+00 : f32
      %31 = vector.broadcast %cst_12 : f32 to vector<8x128xf32>
      %32 = arith.addf %31, %30 : vector<8x128xf32>
      %33 = arith.divf %31, %32 : vector<8x128xf32>
      %c1024_i32_13 = arith.constant 1024 : i32
      %34 = arith.muli %c0_i32_6, %c1024_i32_13 : i32
      %35 = arith.subi %19, %34 : i32
      %36 = vector.broadcast %35 : i32 to vector<8x128xi32>
      %37 = arith.cmpi slt, %17, %36 : vector<8x128xi32>
      %cst_14 = arith.constant 0.000000e+00 : f32
      %38 = vector.broadcast %cst_14 : f32 to vector<8x128xf32>
      %39 = arith.select %37, %33, %38 : vector<8x128xi1>, vector<8x128xf32>
      %cst_15 = arith.constant 0.000000e+00 : f32
      %40 = vector.broadcast %cst_15 : f32 to vector<8x128xf32>
      %41 = arith.select %37, %28, %40 : vector<8x128xi1>, vector<8x128xf32>
      %42 = arith.mulf %39, %41 : vector<8x128xf32>
      %43 = arith.addf %20, %42 : vector<8x128xf32>
      %44 = arith.mulf %39, %39 : vector<8x128xf32>
      %45 = arith.addf %20, %44 : vector<8x128xf32>
      %46 = arith.mulf %41, %41 : vector<8x128xf32>
      %47 = arith.addf %20, %46 : vector<8x128xf32>
      %c1_i32_16 = arith.constant 1 : i32
      %c0_17 = arith.constant 0 : index
      %c0_18 = arith.constant 0 : index
      %c0_19 = arith.constant 0 : index
      %c0_20 = arith.constant 0 : index
      %48 = vector.load %arg6[%c0_17, %c0_18, %c0_19, %c0_20] : memref<1x1x8x128xf32, #tpu.memory_space<vmem>>, vector<1x1x8x128xf32>
      %49 = vector.shape_cast %48 : vector<1x1x8x128xf32> to vector<8x128xf32>
      %50 = arith.addf %49, %43 : vector<8x128xf32>
      %c0_21 = arith.constant 0 : index
      %c0_22 = arith.constant 0 : index
      %c0_23 = arith.constant 0 : index
      %c0_24 = arith.constant 0 : index
      %51 = vector.load %arg6[%c0_21, %c0_22, %c0_23, %c0_24] : memref<1x1x8x128xf32, #tpu.memory_space<vmem>>, vector<1x1x8x128xf32>
      %52 = vector.shape_cast %51 : vector<1x1x8x128xf32> to vector<8x128xf32>
      %53 = vector.shape_cast %50 : vector<8x128xf32> to vector<1x1x8x128xf32>
      tpu.vector_store %arg6[%c0_21, %c0_22, %c0_23, %c0_24], %53 {strides = array<i32>} : memref<1x1x8x128xf32, #tpu.memory_space<vmem>>, vector<1x1x8x128xf32>,
      %c0_25 = arith.constant 0 : index
      %c0_26 = arith.constant 0 : index
      %c0_27 = arith.constant 0 : index
      %c0_28 = arith.constant 0 : index
      %54 = vector.load %arg7[%c0_25, %c0_26, %c0_27, %c0_28] : memref<1x1x8x128xf32, #tpu.memory_space<vmem>>, vector<1x1x8x128xf32>
      %55 = vector.shape_cast %54 : vector<1x1x8x128xf32> to vector<8x128xf32>
      %56 = arith.addf %55, %45 : vector<8x128xf32>
      %c0_29 = arith.constant 0 : index
      %c0_30 = arith.constant 0 : index
      %c0_31 = arith.constant 0 : index
      %c0_32 = arith.constant 0 : index
      %57 = vector.load %arg7[%c0_29, %c0_30, %c0_31, %c0_32] : memref<1x1x8x128xf32, #tpu.memory_space<vmem>>, vector<1x1x8x128xf32>
      %58 = vector.shape_cast %57 : vector<1x1x8x128xf32> to vector<8x128xf32>
      %59 = vector.shape_cast %56 : vector<8x128xf32> to vector<1x1x8x128xf32>
      tpu.vector_store %arg7[%c0_29, %c0_30, %c0_31, %c0_32], %59 {strides = array<i32>} : memref<1x1x8x128xf32, #tpu.memory_space<vmem>>, vector<1x1x8x128xf32>,
      %c0_33 = arith.constant 0 : index
      %c0_34 = arith.constant 0 : index
      %c0_35 = arith.constant 0 : index
      %c0_36 = arith.constant 0 : index
      %60 = vector.load %arg8[%c0_33, %c0_34, %c0_35, %c0_36] : memref<1x1x8x128xf32, #tpu.memory_space<vmem>>, vector<1x1x8x128xf32>
      %61 = vector.shape_cast %60 : vector<1x1x8x128xf32> to vector<8x128xf32>
      %62 = arith.addf %61, %47 : vector<8x128xf32>
      %c0_37 = arith.constant 0 : index
      %c0_38 = arith.constant 0 : index
      %c0_39 = arith.constant 0 : index
      %c0_40 = arith.constant 0 : index
      %63 = vector.load %arg8[%c0_37, %c0_38, %c0_39, %c0_40] : memref<1x1x8x128xf32, #tpu.memory_space<vmem>>, vector<1x1x8x128xf32>
      %64 = vector.shape_cast %63 : vector<1x1x8x128xf32> to vector<8x128xf32>
      %65 = vector.shape_cast %62 : vector<8x128xf32> to vector<1x1x8x128xf32>
      tpu.vector_store %arg8[%c0_37, %c0_38, %c0_39, %c0_40], %65 {strides = array<i32>} : memref<1x1x8x128xf32, #tpu.memory_space<vmem>>, vector<1x1x8x128xf32>,
    } else {
    }
    return
  }
  func.func @transform_0(%arg0: i32, %arg1: i32, %arg2: i32, %arg3: i32) -> (i32, i32, i32, i32) {
    %c1_i32 = arith.constant 1 : i32
    %0 = arith.muli %arg0, %c1_i32 : i32
    %1 = arith.addi %0, %arg3 : i32
    %c0_i32 = arith.constant 0 : i32
    %2 = arith.minsi %1, %c0_i32 : i32
    %c0_i32_0 = arith.constant 0 : i32
    %c0_i32_1 = arith.constant 0 : i32
    return %arg2, %arg1, %2, %c0_i32_0 : i32, i32, i32, i32
  }
  func.func @transform_1(%arg0: i32, %arg1: i32, %arg2: i32, %arg3: i32) -> (i32, i32, i32, i32) {
    %c1_i32 = arith.constant 1 : i32
    %0 = arith.muli %arg0, %c1_i32 : i32
    %1 = arith.addi %0, %arg3 : i32
    %c0_i32 = arith.constant 0 : i32
    %2 = arith.minsi %1, %c0_i32 : i32
    %c0_i32_0 = arith.constant 0 : i32
    %c0_i32_1 = arith.constant 0 : i32
    return %arg2, %arg1, %2, %c0_i32_0 : i32, i32, i32, i32
  }
  func.func @transform_2(%arg0: i32, %arg1: i32, %arg2: i32, %arg3: i32) -> (i32, i32, i32, i32) {
    %c0_i32 = arith.constant 0 : i32
    %c0_i32_0 = arith.constant 0 : i32
    %c0_i32_1 = arith.constant 0 : i32
    return %arg0, %arg1, %c0_i32, %c0_i32_0 : i32, i32, i32, i32
  }
  func.func @transform_3(%arg0: i32, %arg1: i32, %arg2: i32, %arg3: i32) -> (i32, i32, i32, i32) {
    %c0_i32 = arith.constant 0 : i32
    %c0_i32_0 = arith.constant 0 : i32
    %c0_i32_1 = arith.constant 0 : i32
    return %arg0, %arg1, %c0_i32, %c0_i32_0 : i32, i32, i32, i32
  }
  func.func @transform_4(%arg0: i32, %arg1: i32, %arg2: i32, %arg3: i32) -> (i32, i32, i32, i32) {
    %c0_i32 = arith.constant 0 : i32
    %c0_i32_0 = arith.constant 0 : i32
    %c0_i32_1 = arith.constant 0 : i32
    return %arg0, %arg1, %c0_i32, %c0_i32_0 : i32, i32, i32, i32
  }
}

</mosaic_0001>

<llo_original>
// kernel: tpu_custom_call.1
$region0: #{tpu_custom_call.1}
  #allocation0 [shape = 'u32[]', space=smem, size = 0x4, offset = 0x4, fixed_abs, tag = 'smem constant byte address 0x4 - core index']
  #allocation1 [shape = 'u32[72,128]{1,0:T(1,128)}', space=vmem, size = 0x9000, scoped, tag = 'internal scratch']
  %s0 = inlined_call_operand.hbm [shape: f32[2,3,2,128], index: 0, kind: input, shape index: {}]
  %s1 = inlined_call_operand.hbm [shape: f32[2,3,2,128], index: 1, kind: input, shape index: {}]
  %s2 = inlined_call_operand.hbm [shape: f32[2,3,8,128], index: 2, kind: output, shape index: {0}]
  %s3 = inlined_call_operand.hbm [shape: f32[2,3,8,128], index: 3, kind: output, shape index: {1}]
  %s4 = inlined_call_operand.hbm [shape: f32[2,3,8,128], index: 4, kind: output, shape index: {2}]
  %5 = xla_tuple %s2, %s3, %s4
  %s6 = sld [smem:[#allocation0]]
  $region77: #{tpu_custom_call.1} parent=0
    _
  %s8 = ssub.s32 1, %s6
  %s9 = scalar_select 0, %s8, %s6
  $region1: #{tpu_custom_call.1} parent=0
    #allocation2 [shape = 'u8[8192]{0}', space=vmem, size = 0x2000, scoped, tag = 'input window, operand 0']
    #allocation3 [shape = 's32[2]{0}', space=sflag, size = 0x8, scoped, tag = 'scoped memory for tpu_custom_call.1']
    #allocation4 [shape = 's32[2]{0}', space=sflag, size = 0x8, scoped, tag = 'scoped memory for tpu_custom_call.1']
    #allocation5 [shape = 'u8[8192]{0}', space=vmem, size = 0x2000, scoped, tag = 'input window, operand 1']
    #allocation6 [shape = 's32[2]{0}', space=sflag, size = 0x8, scoped, tag = 'scoped memory for tpu_custom_call.1']
    #allocation7 [shape = 'u8[8192]{0}', space=vmem, size = 0x2000, scoped, tag = 'output window, operand 0']
    #allocation8 [shape = 'u8[8192]{0}', space=vmem, size = 0x2000, scoped, tag = 'output window, operand 1']
    #allocation9 [shape = 's32[2]{0}', space=sflag, size = 0x8, scoped, tag = 'scoped memory for tpu_custom_call.1']
    #allocation10 [shape = 'u8[8192]{0}', space=vmem, size = 0x2000, scoped, tag = 'output window, operand 2']
    %10 = vsyncpa [#allocation3], 0
    %s11 = scalar_lea.sflag [#allocation3], 1
    %12 = vsyncpa %s11, 0
    %13 = vsyncpa [#allocation6], 0
    %s14 = scalar_lea.sflag [#allocation6], 1
    %15 = vsyncpa %s14, 0
    %16 = vsyncpa [#allocation4], 0
    %s17 = scalar_lea.sflag [#allocation4], 1
    %18 = vsyncpa %s17, 0
    %19 = vsyncpa [#allocation9], 0
    %s20 = scalar_lea.sflag [#allocation9], 1
    %21 = vsyncpa %s20, 0
    loop: start=0, step=1, limit=14
    $region2: #{tpu_custom_call.1} parent=1 // loop_pre_header
      _
    $region3: #{tpu_custom_call.1} parent=1 // loop_header
      %s23 = sphi 0, %s27
      %p24 = scmp.ge.s32.totalorder %s23, 14
      %s30 = sphi 0, %s56
      %s31 = sphi 0, %s52
      %s32 = sphi 0, %s48
      %s33 = sphi 0, %s44
      %s34 = sphi 0, %s30
      %s35 = sphi 0, %s31
      %s36 = sphi 0, %s32
      %s37 = sphi 0, %s33
      %s38 = sphi 0, %s34
      %s39 = sphi 0, %s35
      %s40 = sphi 0, %s36
      %s41 = sphi 0, %s37
      %s69 = sphi 0, %s71
      %s72 = sphi 0, %s69
      %s73 = sphi 0, %s72
      %s89 = sphi 0, %s73
      %s105 = sphi 0, %s107
      %s108 = sphi 0, %s105
      %s109 = sphi 0, %s108
      %s125 = sphi 0, %s109
      %s133 = sphi 0, %s135
      %s136 = sphi 0, %s133
      %s137 = sphi 0, %s136
      %s153 = sphi 0, %s137
      %s161 = sphi 0, %s163
      %s164 = sphi 0, %s161
      %s165 = sphi 0, %s164
      %s181 = sphi 0, %s165
      %s189 = sphi 0, %s191
      %s192 = sphi 0, %s189
      %s193 = sphi 0, %s192
      %s209 = sphi 0, %s193
    $region4: #{tpu_custom_call.1} parent=1 // loop_header_branch
      %26 = sbr.rel (%p24) target = $region8
    $region5: #{tpu_custom_call.1} parent=1 // loop_body
      %s28 = ssub.s32 %s23, 1
      %s29 = ssub.s32 %s23, 2
      %s42 = sadd.s32 1, %s33
      %p43 = scmp.ge.s32.totalorder %s42, 1
      %s44 = scalar_select %p43, 0, %s42
      %s45 = sadd.s32 1, %s32
      %s46 = scalar_select %p43, %s45, %s32
      %p47 = scmp.ge.s32.totalorder %s46, 2
      %s48 = scalar_select %p47, 0, %s46
      %s49 = sadd.s32 1, %s31
      %s50 = scalar_select %p47, %s49, %s31
      %p51 = scmp.ge.s32.totalorder %s50, 3
      %s52 = scalar_select %p51, 0, %s50
      %s53 = sadd.s32 1, %s30
      %s54 = scalar_select %p51, %s53, %s30
      %p55 = scmp.ge.s32.totalorder %s54, 2
      %s56 = scalar_select %p55, 0, %s54
      %s57 = sadd.s32 %s30, %s33
      %p58 = scmp.lt.s32.totalorder %s57, 0
      %s59 = scalar_select %p58, %s57, 0
      %s60 = sadd.s32 %s56, %s44
      %p61 = scmp.lt.s32.totalorder %s60, 0
      %s62 = scalar_select %p61, %s60, 0
      %s63 = ssub.s32 %s32, %s48
      %s64 = ssub.s32 %s31, %s52
      %s65 = sor.u32 %s63, %s64
      %s66 = ssub.s32 %s59, %s62
      %s67 = sor.u32 %s65, %s66
      %p68 = scmp.eq.s32.totalorder %s67, 0
      %s70 = sadd.s32 %s69, 1
      %s71 = scalar_select %p68, %s69, %s70
      %p74 = pneg %p68
      %p75 = scmp.eq.s32.totalorder %s23, 11
      %p76 = por %p74, %p75
      %p77 = scmp.ne.s32.totalorder %s69, %s72
      %p78 = scmp.eq.s32.totalorder %s23, 0
      %p79 = por %p77, %p78
      %p80 = scmp.ne.s32.totalorder %s69, %s72
      %p81 = scmp.eq.s32.totalorder %s28, 11
      %p82 = por %p80, %p81
      %p83 = scmp.ne.s32.totalorder %s72, %s73
      %p84 = scmp.eq.s32.totalorder %s28, 0
      %p85 = por %p83, %p84
      %p86 = scmp.ne.s32.totalorder %s72, %s73
      %p87 = scmp.eq.s32.totalorder %s29, 11
      %p88 = por %p86, %p87
      %p90 = scmp.ne.s32.totalorder %s73, %s89
      %p91 = scmp.eq.s32.totalorder %s29, 0
      %p92 = por %p90, %p91
      %s93 = sadd.s32 %s30, %s33
      %p94 = scmp.lt.s32.totalorder %s93, 0
      %s95 = scalar_select %p94, %s93, 0
      %s96 = sadd.s32 %s56, %s44
      %p97 = scmp.lt.s32.totalorder %s96, 0
      %s98 = scalar_select %p97, %s96, 0
      %s99 = ssub.s32 %s32, %s48
      %s100 = ssub.s32 %s31, %s52
      %s101 = sor.u32 %s99, %s100
      %s102 = ssub.s32 %s95, %s98
      %s103 = sor.u32 %s101, %s102
      %p104 = scmp.eq.s32.totalorder %s103, 0
      %s106 = sadd.s32 %s105, 1
      %s107 = scalar_select %p104, %s105, %s106
      %p110 = pneg %p104
      %p111 = scmp.eq.s32.totalorder %s23, 11
      %p112 = por %p110, %p111
      %p113 = scmp.ne.s32.totalorder %s105, %s108
      %p114 = scmp.eq.s32.totalorder %s23, 0
      %p115 = por %p113, %p114
      %p116 = scmp.ne.s32.totalorder %s105, %s108
      %p117 = scmp.eq.s32.totalorder %s28, 11
      %p118 = por %p116, %p117
      %p119 = scmp.ne.s32.totalorder %s108, %s109
      %p120 = scmp.eq.s32.totalorder %s28, 0
      %p121 = por %p119, %p120
      %p122 = scmp.ne.s32.totalorder %s108, %s109
      %p123 = scmp.eq.s32.totalorder %s29, 11
      %p124 = por %p122, %p123
      %p126 = scmp.ne.s32.totalorder %s109, %s125
      %p127 = scmp.eq.s32.totalorder %s29, 0
      %p128 = por %p126, %p127
      %s129 = ssub.s32 %s30, %s56
      %s130 = ssub.s32 %s31, %s52
      %s131 = sor.u32 %s129, %s130
      %p132 = scmp.eq.s32.totalorder %s131, 0
      %s134 = sadd.s32 %s133, 1
      %s135 = scalar_select %p132, %s133, %s134
      %p138 = pneg %p132
      %p139 = scmp.eq.s32.totalorder %s23, 11
      %p140 = por %p138, %p139
      %p141 = scmp.ne.s32.totalorder %s133, %s136
      %p142 = scmp.eq.s32.totalorder %s23, 0
      %p143 = por %p141, %p142
      %p144 = scmp.ne.s32.totalorder %s133, %s136
      %p145 = scmp.eq.s32.totalorder %s28, 11
      %p146 = por %p144, %p145
      %p147 = scmp.ne.s32.totalorder %s136, %s137
      %p148 = scmp.eq.s32.totalorder %s28, 0
      %p149 = por %p147, %p148
      %p150 = scmp.ne.s32.totalorder %s136, %s137
      %p151 = scmp.eq.s32.totalorder %s29, 11
      %p152 = por %p150, %p151
      %p154 = scmp.ne.s32.totalorder %s137, %s153
      %p155 = scmp.eq.s32.totalorder %s29, 0
      %p156 = por %p154, %p155
      %s157 = ssub.s32 %s30, %s56
      %s158 = ssub.s32 %s31, %s52
      %s159 = sor.u32 %s157, %s158
      %p160 = scmp.eq.s32.totalorder %s159, 0
      %s162 = sadd.s32 %s161, 1
      %s163 = scalar_select %p160, %s161, %s162
      %p166 = pneg %p160
      %p167 = scmp.eq.s32.totalorder %s23, 11
      %p168 = por %p166, %p167
      %p169 = scmp.ne.s32.totalorder %s161, %s164
      %p170 = scmp.eq.s32.totalorder %s23, 0
      %p171 = por %p169, %p170
      %p172 = scmp.ne.s32.totalorder %s161, %s164
      %p173 = scmp.eq.s32.totalorder %s28, 11
      %p174 = por %p172, %p173
      %p175 = scmp.ne.s32.totalorder %s164, %s165
      %p176 = scmp.eq.s32.totalorder %s28, 0
      %p177 = por %p175, %p176
      %p178 = scmp.ne.s32.totalorder %s164, %s165
      %p179 = scmp.eq.s32.totalorder %s29, 11
      %p180 = por %p178, %p179
      %p182 = scmp.ne.s32.totalorder %s165, %s181
      %p183 = scmp.eq.s32.totalorder %s29, 0
      %p184 = por %p182, %p183
      %s185 = ssub.s32 %s30, %s56
      %s186 = ssub.s32 %s31, %s52
      %s187 = sor.u32 %s185, %s186
      %p188 = scmp.eq.s32.totalorder %s187, 0
      %s190 = sadd.s32 %s189, 1
      %s191 = scalar_select %p188, %s189, %s190
      %p194 = pneg %p188
      %p195 = scmp.eq.s32.totalorder %s23, 11
      %p196 = por %p194, %p195
      %p197 = scmp.ne.s32.totalorder %s189, %s192
      %p198 = scmp.eq.s32.totalorder %s23, 0
      %p199 = por %p197, %p198
      %p200 = scmp.ne.s32.totalorder %s189, %s192
      %p201 = scmp.eq.s32.totalorder %s28, 11
      %p202 = por %p200, %p201
      %p203 = scmp.ne.s32.totalorder %s192, %s193
      %p204 = scmp.eq.s32.totalorder %s28, 0
      %p205 = por %p203, %p204
      %p206 = scmp.ne.s32.totalorder %s192, %s193
      %p207 = scmp.eq.s32.totalorder %s29, 11
      %p208 = por %p206, %p207
      %p210 = scmp.ne.s32.totalorder %s193, %s209
      %p211 = scmp.eq.s32.totalorder %s29, 0
      %p212 = por %p210, %p211
      %p213 = scmp.le.s32.totalorder 1, %s23
      %p214 = scmp.lt.s32.totalorder %s23, 13
      %p215 = pnand %p213, %p214
      %p216 = pneg %p215
      // Predicated region
      $region9: #{tpu_custom_call.1} parent=5 // pred_check
        _
      $region10: #{tpu_custom_call.1} parent=5 // pred_check_branch
        %218 = sbr.rel (%p215) target = $region12
      $region11: #{tpu_custom_call.1} parent=5 // pred_region
        %s219 = ssub.s32 %s23, 1
      $region12: #{tpu_custom_call.1} parent=5 // pred_fallthru
        _
      %p220 = scmp.lt.s32.totalorder %s23, 12
      // Predicated region
      $region13: #{tpu_custom_call.1} parent=5 // pred_check
        %p221 = pneg %p220
      $region14: #{tpu_custom_call.1} parent=5 // pred_check_branch
        %223 = sbr.rel (%p221) target = $region16
      $region15: #{tpu_custom_call.1} parent=5 // pred_region
        // Predicated region
        $region17: #{tpu_custom_call.1} parent=15 // pred_check
          %p224 = pneg %p79
        $region18: #{tpu_custom_call.1} parent=15 // pred_check_branch
          %226 = sbr.rel (%p224) target = $region20
        $region19: #{tpu_custom_call.1} parent=15 // pred_region
          %s227 = sand.u32 %s69, 1
          %s228 = scalar_lea.sflag [#allocation3], %s227
          %s229 = sand.u32 %s69, 1
          %s230 = smul.addr %s229, 8
          %s231 = scalar_lea.vmem [#allocation2], %s230
          %s232 = sadd.s32 %s30, %s33
          %p233 = scmp.lt.s32.totalorder %s232, 0
          %s234 = scalar_select %p233, %s232, 0
          %s235 = smul.u32 4, %s234
          %s236 = ssub.s32 1, %s235
          %s237 = smul.u32 2, %s236
          %s238 = ssub.s32 8, %s237
          %s239 = sshll.u32 %s238, 4
          %240 = vsyncadd %s228, %s239
          %p241 = scmp.ne.s32.totalorder 0, %s237
          %s242 = sadd.s32 %s235, %s31
          %s243 = smul.addr %s32, 3
          %s244 = sadd.s32 %s242, %s243
          %s245 = smul.addr %s244, 2
          %s246 = scalar_lea.hbm %s0, %s245
          %s247 = smul.u32 2, %s236
          %s248 = sshll.u32 %s246, 4
          %s249 = int_to_ptr.hbm [resolvable:$true] %s248
          %s250 = sshll.u32 %s231, 4
          %s251 = int_to_ptr.vmem [resolvable:$true] %s250
          %s252 = sshll.u32 %s247, 4
          %256 = dma.hbm_to_vmem [thread:$0]  (%p241), %s249, %s252, %s251, %s228, 32, 32, 2
        $region20: #{tpu_custom_call.1} parent=15 // pred_fallthru
          _
        // Predicated region
        $region21: #{tpu_custom_call.1} parent=15 // pred_check
          %p257 = pneg %p115
        $region22: #{tpu_custom_call.1} parent=15 // pred_check_branch
          %259 = sbr.rel (%p257) target = $region24
        $region23: #{tpu_custom_call.1} parent=15 // pred_region
          %s260 = sand.u32 %s105, 1
          %s261 = scalar_lea.sflag [#allocation6], %s260
          %s262 = sand.u32 %s105, 1
          %s263 = smul.addr %s262, 8
          %s264 = scalar_lea.vmem [#allocation5], %s263
          %s265 = sadd.s32 %s30, %s33
          %p266 = scmp.lt.s32.totalorder %s265, 0
          %s267 = scalar_select %p266, %s265, 0
          %s268 = smul.u32 4, %s267
          %s269 = ssub.s32 1, %s268
          %s270 = smul.u32 2, %s269
          %s271 = ssub.s32 8, %s270
          %s272 = sshll.u32 %s271, 4
          %273 = vsyncadd %s261, %s272
          %p274 = scmp.ne.s32.totalorder 0, %s270
          %s275 = sadd.s32 %s268, %s31
          %s276 = smul.addr %s32, 3
          %s277 = sadd.s32 %s275, %s276
          %s278 = smul.addr %s277, 2
          %s279 = scalar_lea.hbm %s1, %s278
          %s280 = smul.u32 2, %s269
          %s281 = sshll.u32 %s279, 4
          %s282 = int_to_ptr.hbm [resolvable:$true] %s281
          %s283 = sshll.u32 %s264, 4
          %s284 = int_to_ptr.vmem [resolvable:$true] %s283
          %s285 = sshll.u32 %s280, 4
          %289 = dma.hbm_to_vmem [thread:$0]  (%p274), %s282, %s285, %s284, %s261, 32, 32, 2
        $region24: #{tpu_custom_call.1} parent=15 // pred_fallthru
          _
      $region16: #{tpu_custom_call.1} parent=5 // pred_fallthru
        _
      %p290 = scmp.le.s32.totalorder 1, %s23
      %p291 = scmp.lt.s32.totalorder %s23, 13
      %p292 = pnand %p290, %p291
      %p293 = pneg %p292
      // Predicated region
      $region25: #{tpu_custom_call.1} parent=5 // pred_check
        _
      $region26: #{tpu_custom_call.1} parent=5 // pred_check_branch
        %295 = sbr.rel (%p292) target = $region28
      $region27: #{tpu_custom_call.1} parent=5 // pred_region
        %s296 = ssub.s32 %s23, 1
        %s297 = sand.u32 %s72, 1
        %s298 = scalar_lea.sflag [#allocation3], %s297
        %s299 = sand.u32 %s72, 1
        %s300 = smul.addr %s299, 8
        %s301 = scalar_lea.vmem [#allocation2], %s300
        // Predicated region
        $region29: #{tpu_custom_call.1} parent=27 // pred_check
          %p302 = pneg %p85
        $region30: #{tpu_custom_call.1} parent=27 // pred_check_branch
          %304 = sbr.rel (%p302) target = $region32
        $region31: #{tpu_custom_call.1} parent=27 // pred_region
          %306 = dma.done %s298, 128
        $region32: #{tpu_custom_call.1} parent=27 // pred_fallthru
          _
        %s307 = sand.u32 %s108, 1
        %s308 = scalar_lea.sflag [#allocation6], %s307
        %s309 = sand.u32 %s108, 1
        %s310 = smul.addr %s309, 8
        %s311 = scalar_lea.vmem [#allocation5], %s310
        // Predicated region
        $region33: #{tpu_custom_call.1} parent=27 // pred_check
          %p312 = pneg %p121
        $region34: #{tpu_custom_call.1} parent=27 // pred_check_branch
          %314 = sbr.rel (%p312) target = $region36
        $region35: #{tpu_custom_call.1} parent=27 // pred_region
          %316 = dma.done %s308, 128
        $region36: #{tpu_custom_call.1} parent=27 // pred_fallthru
          _
        %s317 = sand.u32 %s72, 1
        %s318 = scalar_lea.sflag [#allocation3], %s317
        %s319 = sand.u32 %s72, 1
        %s320 = smul.addr %s319, 8
        %s321 = scalar_lea.vmem [#allocation2], %s320
        %p322 = pneg %p85
        %p323 = pneg %p82
        %s324 = sand.u32 %s108, 1
        %s325 = scalar_lea.sflag [#allocation6], %s324
        %s326 = sand.u32 %s108, 1
        %s327 = smul.addr %s326, 8
        %s328 = scalar_lea.vmem [#allocation5], %s327
        %p329 = pneg %p121
        %p330 = pneg %p118
        %p331 = pneg %p149
        %p332 = pneg %p146
        %s333 = sand.u32 %s136, 1
        %s334 = scalar_lea.sflag [#allocation4], %s333
        %s335 = sand.u32 %s136, 1
        %s336 = smul.addr %s335, 8
        %s337 = scalar_lea.vmem [#allocation7], %s336
        %p338 = pneg %p177
        %p339 = pneg %p174
        %s340 = sand.u32 %s28, 1
        %s341 = scalar_lea.sflag [#allocation9], %s340
        %s342 = sand.u32 %s164, 1
        %s343 = smul.addr %s342, 8
        %s344 = scalar_lea.vmem [#allocation8], %s343
        %p345 = pneg %p205
        %p346 = pneg %p202
        %s347 = sand.u32 %s28, 1
        %s348 = scalar_lea.sflag [#allocation9], %s347
        %s349 = sand.u32 %s192, 1
        %s350 = smul.addr %s349, 8
        %s351 = scalar_lea.vmem [#allocation10], %s350
        %s352 = sadd.s32 %s34, %s37
        %p353 = scmp.lt.s32.totalorder %s352, 0
        %s354 = scalar_select %p353, %s352, 0
        %s355 = smul.u32 4, %s354
        %s356 = ssub.s32 1, %s355
        %s357 = smul.u32 2, %s356
        %s358 = sadd.s32 %s34, %s37
        %p359 = scmp.lt.s32.totalorder %s358, 0
        %s360 = scalar_select %p359, %s358, 0
        %s361 = smul.u32 4, %s360
        %s362 = ssub.s32 1, %s361
        %s363 = smul.u32 2, %s362
        %p364 = scmp.eq.s32.totalorder %s36, 0
        %p365 = scmp.eq.s32.totalorder %s37, 0
        %p366 = pnand %p364, %p365
        %p367 = pneg %p366
        // Predicated region
        $region37: #{tpu_custom_call.1} parent=27 // pred_check
          _
        $region38: #{tpu_custom_call.1} parent=27 // pred_check_branch
          %369 = sbr.rel (%p366) target = $region40
        $region39: #{tpu_custom_call.1} parent=27 // pred_region
          %370 = vst [vmem:[%s337] sm:$0xff] 0.0
          %371 = vst [vmem:[%s344] sm:$0xff] 0.0
          %372 = vst [vmem:[%s351] sm:$0xff] 0.0
        $region40: #{tpu_custom_call.1} parent=27 // pred_fallthru
          _
        %s373 = sadd.s32 %s34, %s37
        %p374 = scmp.lt.s32.totalorder %s373, 0
        // Predicated region
        $region41: #{tpu_custom_call.1} parent=27 // pred_check
          %p375 = pneg %p374
        $region42: #{tpu_custom_call.1} parent=27 // pred_check_branch
          %377 = sbr.rel (%p375) target = $region44
        $region43: #{tpu_custom_call.1} parent=27 // pred_region
          %v378 = vld [vmem:[%s301] sm:$0xff]
          %v379 = vld [vmem:[%s311] sm:$0xff]
          %v380 = vxor.u32 %v378, 2147483648
          %v381 = vmul.f32 %v380, 1.442695
          %v382 = vpow.pop %v381
          %v383 = vadd.f32 %v382, 1.0
          %v384 = vrcp.pop %v383
          %v385 = vmul.f32 %v383, %v384
          %v386 = vsub.f32 1.0, %v385
          %v387 = vmul.f32 %v384, %v386
          %v388 = vadd.f32 %v384, %v387
          %vm389 = vweird.f32 %v383
          %vm390 = vweird.f32 %v384
          %vm391 = vmor %vm389, %vm390
          %v392 = vsel %vm391, %v384, %v388
          %v393 = vand.u32 2147483647, %v383
          %vm394 = vcmp.eq.f32.partialorder %v393, 8.507059e+37
          %v395 = vand.u32 %v383, 2147483648
          %v396 = vor.u32 1.1754944e-38, %v395
          %v397 = vsel %vm394, %v396, %v392
          %v398 = vmul.f32 1.0, %v397
          %v399 = vmul.f32 %v398, %v379
          %v400 = vadd.f32 %v399, 0.0
          %v401 = vmul.f32 %v398, %v398
          %v402 = vadd.f32 %v401, 0.0
          %v403 = vmul.f32 %v379, %v379
          %v404 = vadd.f32 %v403, 0.0
          %v405 = vld [vmem:[%s337] sm:$0xff]
          %v406 = vadd.f32 %v405, %v400
          %407 = vst [vmem:[%s337] sm:$0xff] %v406
          %v408 = vld [vmem:[%s344] sm:$0xff]
          %v409 = vadd.f32 %v408, %v402
          %410 = vst [vmem:[%s344] sm:$0xff] %v409
          %v411 = vld [vmem:[%s351] sm:$0xff]
          %v412 = vadd.f32 %v411, %v404
          %413 = vst [vmem:[%s351] sm:$0xff] %v412
        $region44: #{tpu_custom_call.1} parent=27 // pred_fallthru
          _
        %p414 = scmp.ge.s32.totalorder %s373, 0
        // Predicated region
        $region45: #{tpu_custom_call.1} parent=27 // pred_check
          %p415 = pneg %p414
        $region46: #{tpu_custom_call.1} parent=27 // pred_check_branch
          %417 = sbr.rel (%p415) target = $region48
        $region47: #{tpu_custom_call.1} parent=27 // pred_region
          %v418 = vlaneseq
          %v419 = vshrl.u32 %v418, 7
          %v420 = vlaneseq
          %v421 = vand.u32 %v420, 127
          %v422 = vmul.u32 %v419, 128
          %v423 = vadd.s32 %v422, %v421
          %s424 = smul.u32 %s373, 1024
          %s425 = ssub.s32 256, %s424
          %v426 = vld [vmem:[%s301] sm:$0xff]
          %v427 = vld [vmem:[%s311] sm:$0xff]
          %v428 = vxor.u32 %v426, 2147483648
          %v429 = vmul.f32 %v428, 1.442695
          %v430 = vpow.pop %v429
          %v431 = vadd.f32 %v430, 1.0
          %v432 = vrcp.pop %v431
          %v433 = vmul.f32 %v431, %v432
          %v434 = vsub.f32 1.0, %v433
          %v435 = vmul.f32 %v432, %v434
          %v436 = vadd.f32 %v432, %v435
          %vm437 = vweird.f32 %v431
          %vm438 = vweird.f32 %v432
          %vm439 = vmor %vm437, %vm438
          %v440 = vsel %vm439, %v432, %v436
          %v441 = vand.u32 2147483647, %v431
          %vm442 = vcmp.eq.f32.partialorder %v441, 8.507059e+37
          %v443 = vand.u32 %v431, 2147483648
          %v444 = vor.u32 1.1754944e-38, %v443
          %v445 = vsel %vm442, %v444, %v440
          %v446 = vmul.f32 1.0, %v445
          %v447 = vstv %s425
          %vm448 = vcmp.lt.s32.totalorder %v423, %v447
          %v449 = vsel %vm448, %v446, 0.0
          %v450 = vsel %vm448, %v427, 0.0
          %v451 = vmul.f32 %v449, %v450
          %v452 = vadd.f32 %v451, 0.0
          %v453 = vmul.f32 %v449, %v449
          %v454 = vadd.f32 %v453, 0.0
          %v455 = vmul.f32 %v450, %v450
          %v456 = vadd.f32 %v455, 0.0
          %v457 = vld [vmem:[%s337] sm:$0xff]
          %v458 = vadd.f32 %v457, %v452
          %459 = vst [vmem:[%s337] sm:$0xff] %v458
          %v460 = vld [vmem:[%s344] sm:$0xff]
          %v461 = vadd.f32 %v460, %v454
          %462 = vst [vmem:[%s344] sm:$0xff] %v461
          %v463 = vld [vmem:[%s351] sm:$0xff]
          %v464 = vadd.f32 %v463, %v456
          %465 = vst [vmem:[%s351] sm:$0xff] %v464
        $region48: #{tpu_custom_call.1} parent=27 // pred_fallthru
          _
        %s466 = sand.u32 %s136, 1
        %s467 = scalar_lea.sflag [#allocation4], %s466
        %s468 = sand.u32 %s136, 1
        %s469 = smul.addr %s468, 8
        %s470 = scalar_lea.vmem [#allocation7], %s469
        %s471 = sand.u32 %s28, 1
        %s472 = scalar_lea.sflag [#allocation9], %s471
        %s473 = sand.u32 %s164, 1
        %s474 = smul.addr %s473, 8
        %s475 = scalar_lea.vmem [#allocation8], %s474
        %s476 = sand.u32 %s28, 1
        %s477 = scalar_lea.sflag [#allocation9], %s476
        %s478 = sand.u32 %s192, 1
        %s479 = smul.addr %s478, 8
        %s480 = scalar_lea.vmem [#allocation10], %s479
        // Predicated region
        $region49: #{tpu_custom_call.1} parent=27 // pred_check
          %p481 = pneg %p146
        $region50: #{tpu_custom_call.1} parent=27 // pred_check_branch
          %483 = sbr.rel (%p481) target = $region52
        $region51: #{tpu_custom_call.1} parent=27 // pred_region
          %485 = vsyncadd %s467, 0
          %s486 = smul.addr %s34, 3
          %s487 = sadd.s32 %s35, %s486
          %s488 = smul.addr %s487, 8
          %s489 = scalar_lea.hbm %s2, %s488
          %s491 = sshll.u32 %s470, 4
          %s492 = int_to_ptr.vmem [resolvable:$true] %s491
          %s493 = sshll.u32 %s489, 4
          %s494 = int_to_ptr.hbm [resolvable:$true] %s493
          %496 = dma.vmem_to_hbm [thread:$0]  %s492, 128, %s494, %s467
        $region52: #{tpu_custom_call.1} parent=27 // pred_fallthru
          _
        // Predicated region
        $region53: #{tpu_custom_call.1} parent=27 // pred_check
          %p497 = pneg %p174
        $region54: #{tpu_custom_call.1} parent=27 // pred_check_branch
          %499 = sbr.rel (%p497) target = $region56
        $region55: #{tpu_custom_call.1} parent=27 // pred_region
          %501 = vsyncadd %s472, 0
          %s502 = smul.addr %s34, 3
          %s503 = sadd.s32 %s35, %s502
          %s504 = smul.addr %s503, 8
          %s505 = scalar_lea.hbm %s3, %s504
          %s507 = sshll.u32 %s475, 4
          %s508 = int_to_ptr.vmem [resolvable:$true] %s507
          %s509 = sshll.u32 %s505, 4
          %s510 = int_to_ptr.hbm [resolvable:$true] %s509
          %512 = dma.vmem_to_hbm [thread:$0]  %s508, 128, %s510, %s472
        $region56: #{tpu_custom_call.1} parent=27 // pred_fallthru
          _
        // Predicated region
        $region57: #{tpu_custom_call.1} parent=27 // pred_check
          %p513 = pneg %p202
        $region58: #{tpu_custom_call.1} parent=27 // pred_check_branch
          %515 = sbr.rel (%p513) target = $region60
        $region59: #{tpu_custom_call.1} parent=27 // pred_region
          %517 = vsyncadd %s477, 0
          %s518 = smul.addr %s34, 3
          %s519 = sadd.s32 %s35, %s518
          %s520 = smul.addr %s519, 8
          %s521 = scalar_lea.hbm %s4, %s520
          %s523 = sshll.u32 %s480, 4
          %s524 = int_to_ptr.vmem [resolvable:$true] %s523
          %s525 = sshll.u32 %s521, 4
          %s526 = int_to_ptr.hbm [resolvable:$true] %s525
          %528 = dma.vmem_to_hbm [thread:$0]  %s524, 128, %s526, %s477
        $region60: #{tpu_custom_call.1} parent=27 // pred_fallthru
          _
      $region28: #{tpu_custom_call.1} parent=5 // pred_fallthru
        _
      %p529 = scmp.le.s32.totalorder 2, %s23
      // Predicated region
      $region61: #{tpu_custom_call.1} parent=5 // pred_check
        %p530 = pneg %p529
      $region62: #{tpu_custom_call.1} parent=5 // pred_check_branch
        %532 = sbr.rel (%p530) target = $region64
      $region63: #{tpu_custom_call.1} parent=5 // pred_region
        %s533 = ssub.s32 %s23, 2
        // Predicated region
        $region65: #{tpu_custom_call.1} parent=63 // pred_check
          %p534 = pneg %p152
        $region66: #{tpu_custom_call.1} parent=63 // pred_check_branch
          %536 = sbr.rel (%p534) target = $region68
        $region67: #{tpu_custom_call.1} parent=63 // pred_region
          %s537 = sand.u32 %s137, 1
          %s538 = scalar_lea.sflag [#allocation4], %s537
          %s539 = sand.u32 %s137, 1
          %s540 = smul.addr %s539, 8
          %s541 = scalar_lea.vmem [#allocation7], %s540
          %543 = dma.done %s538, 128
        $region68: #{tpu_custom_call.1} parent=63 // pred_fallthru
          _
        // Predicated region
        $region69: #{tpu_custom_call.1} parent=63 // pred_check
          %p544 = pneg %p180
        $region70: #{tpu_custom_call.1} parent=63 // pred_check_branch
          %546 = sbr.rel (%p544) target = $region72
        $region71: #{tpu_custom_call.1} parent=63 // pred_region
          %s547 = sand.u32 %s29, 1
          %s548 = scalar_lea.sflag [#allocation9], %s547
          %s549 = sand.u32 %s165, 1
          %s550 = smul.addr %s549, 8
          %s551 = scalar_lea.vmem [#allocation8], %s550
          %553 = dma.done %s548, 128
        $region72: #{tpu_custom_call.1} parent=63 // pred_fallthru
          _
        // Predicated region
        $region73: #{tpu_custom_call.1} parent=63 // pred_check
          %p554 = pneg %p208
        $region74: #{tpu_custom_call.1} parent=63 // pred_check_branch
          %556 = sbr.rel (%p554) target = $region76
        $region75: #{tpu_custom_call.1} parent=63 // pred_region
          %s557 = sand.u32 %s29, 1
          %s558 = scalar_lea.sflag [#allocation9], %s557
          %s559 = sand.u32 %s193, 1
          %s560 = smul.addr %s559, 8
          %s561 = scalar_lea.vmem [#allocation10], %s560
          %563 = dma.done %s558, 128
        $region76: #{tpu_custom_call.1} parent=63 // pred_fallthru
          _
      $region64: #{tpu_custom_call.1} parent=5 // pred_fallthru
        _
    $region6: #{tpu_custom_call.1} parent=1 // loop_footer
      %s27 = sadd.s32 1, %s23
    $region7: #{tpu_custom_call.1} parent=1 // loop_footer_branch
      %22 = sbr.rel target = $region3
    $region8: #{tpu_custom_call.1} parent=1 // loop_exit
      _
    %564 = vsyncpa [#allocation3], 1
    %s565 = scalar_lea.sflag [#allocation3], 1
    %566 = vsyncpa %s565, 1
    %567 = vsyncpa [#allocation6], 1
    %s568 = scalar_lea.sflag [#allocation6], 1
    %569 = vsyncpa %s568, 1
    %570 = vsyncpa [#allocation4], 1
    %s571 = scalar_lea.sflag [#allocation4], 1
    %572 = vsyncpa %s571, 1
    %573 = vsyncpa [#allocation9], 1
    %s574 = scalar_lea.sflag [#allocation9], 1
    %575 = vsyncpa %s574, 1

</llo_original>
